<compile_context>
chip_gen: v7x
topology: tpu7x:2x2x1
jax: 0.10.0
libtpu: 0.0.40
codegen_flags: <defaults>
</compile_context>

<pallas_src>
import math
import numpy as np
import jax
import jax.numpy as jnp
from jax.experimental import pallas as pl
from jax.experimental.pallas import tpu as pltpu


# ---------------------------------------------------------------------------
# Kernel
# ---------------------------------------------------------------------------
def _upsample_kernel(x_ref, w_ref, b_ref, o_ref):
    # x_ref: (TILE, r*C)  w_ref: (r*C, r*f*C)  b_ref: (1, r*f*C)  o_ref: (TILE, r*f*C)
    h = jnp.tanh(x_ref[...].astype(jnp.float32))
    y = jnp.dot(h, w_ref[...], preferred_element_type=jnp.float32)
    o_ref[...] = (y + b_ref[...]).astype(o_ref.dtype)


# ---------------------------------------------------------------------------
# Helpers
# ---------------------------------------------------------------------------
def _vmem_capacity_bytes(default=64 << 20):
    """Per-core VMEM capacity; conservative (v7x-sized) fallback if unknown."""
    try:
        info = pltpu.get_tpu_info()
        cap = getattr(info, "vmem_capacity_bytes", None)
        if cap:
            return int(cap)
    except Exception:
        pass
    return default


def _pick_pack_factor(C, FC, max_cols=2048):
    """Number of time steps packed per row so the output row is 128-lane dense
    (r*FC % 128 == 0, >=256) and the matmul K dim (r*C) is reasonably wide."""
    r = 128 // math.gcd(FC, 128)
    if r * FC > max_cols:
        return 1                      # FC too awkward/wide; full-width block is still legal
    while (r * C < 128 or r * FC < 256) and 2 * r * FC <= max_cols:
        r *= 2
    return r


def _padded_bytes(rows, cols, itemsize):
    """VMEM footprint of one (rows, cols) block after (8, 128) tiling."""
    return pl.cdiv(rows, 8) * 8 * max(128, pl.cdiv(cols, 128) * 128) * itemsize


# ---------------------------------------------------------------------------
# Wrapper
# ---------------------------------------------------------------------------
def upsample(x, weight, bias, factor, *, out_dtype=None, row_tile=None):
    """_Upsample forward.

    x:      (B, T, C) float32 or bfloat16 (time-major, channels-last)
    weight: (C_in, C_out, factor)  -- PyTorch ConvTranspose1d weight layout
    bias:   (C_out,)
    returns (B, T * factor, C_out) in `out_dtype` (default: x.dtype)
    """
    B, T, C = x.shape
    c_in, c_out, f = weight.shape
    assert c_in == C and f == factor
    FC = factor * c_out
    if out_dtype is None:
        out_dtype = x.dtype

    # --- lane packing: r time steps per row, block-diagonal weight -----------
    r = _pick_pack_factor(C, FC)
    RC, RFC = r * C, r * FC

    # (C_in, C_out, f) -> (C_in, f*C_out); column k*C_out + o holds W[:, o, k]
    w_flat = jnp.transpose(weight, (0, 2, 1)).reshape(C, FC).astype(jnp.float32)
    # Block-diagonal (r*C, r*f*C): block (p, p) == w_flat.
    w_bd = (jnp.eye(r, dtype=jnp.float32)[:, None, :, None]
            * w_flat[None, :, None, :]).reshape(RC, RFC)
    b_bd = jnp.tile(bias.astype(jnp.float32), factor * r).reshape(1, RFC)

    # --- flatten batch+time and pack (free row-major views; zero-pad ragged) --
    N = B * T                                   # raw time rows
    M = pl.cdiv(N, r)                           # packed rows
    x_rows = x.reshape(N, C)
    if M * r != N:
        x_rows = jnp.pad(x_rows, ((0, M * r - N), (0, 0)))
    x_packed = x_rows.reshape(M, RC)

    # --- generation-aware tile choice + matching vmem limit ------------------
    in_b = x.dtype.itemsize
    out_b = np.dtype(out_dtype).itemsize
    cap = _vmem_capacity_bytes()
    fixed = 2 * _padded_bytes(RC, RFC, 4) + 2 * _padded_bytes(1, RFC, 4)   # weight + bias (double-buffered)
    per_row = 2 * (_padded_bytes(1, RC, in_b) // 8 + _padded_bytes(1, RFC, out_b) // 8)
    if row_tile is None:
        budget = cap // 2                       # 64 MiB on v5e/v6e, 32 MiB on v7x
        max_rows = max(8, (budget - fixed) // max(per_row, 1))
        row_tile = min(max_rows, 4096, pl.cdiv(M, 8) * 8)
        row_tile = max(8, (row_tile // 8) * 8)
    else:
        row_tile = max(8, pl.cdiv(int(row_tile), 8) * 8)
    vmem_limit = int(min(cap, max(16 << 20, fixed + per_row * row_tile + (4 << 20))))

    # Pad packed rows to a multiple of the tile (no divisibility requirement on T).
    M_pad = pl.cdiv(M, row_tile) * row_tile
    if M_pad != M:
        x_packed = jnp.pad(x_packed, ((0, M_pad - M), (0, 0)))
    n_tiles = M_pad // row_tile

    out = pl.pallas_call(
        _upsample_kernel,
        out_shape=jax.ShapeDtypeStruct((M_pad, RFC), out_dtype),
        grid=(n_tiles,),
        in_specs=[
            pl.BlockSpec((row_tile, RC), lambda i: (i, 0)),
            pl.BlockSpec((RC, RFC), lambda i: (0, 0)),
            pl.BlockSpec((1, RFC), lambda i: (0, 0)),
        ],
        out_specs=pl.BlockSpec((row_tile, RFC), lambda i: (i, 0)),
        compiler_params=pltpu.CompilerParams(
            dimension_semantics=("parallel",),
            vmem_limit_bytes=vmem_limit),
    )(x_packed, w_bd, b_bd)

    # (M_pad, r*f*C) row-major == padded (N*f, C); slice off padding, reshape free.
    out = out.reshape(M_pad * r * factor, c_out)[: N * factor]
    return out.reshape(B, T * factor, c_out)


# ---------------------------------------------------------------------------
# Pure numpy reference of the PyTorch forward pass (Tanh -> ConvTranspose1d)
# ---------------------------------------------------------------------------
def reference_upsample(x, weight, bias, factor):
    x = np.asarray(x, np.float32)
    w = np.asarray(weight, np.float32)      # (C_in, C_out, f)
    b = np.asarray(bias, np.float32)        # (C_out,)
    h = np.tanh(x)                          # (B, T, C_in)
    # out[b, t*f + k, o] = sum_i h[b, t, i] * W[i, o, k] + b[o]
    y = np.einsum("bti,iok->btko", h, w) + b[None, None, None, :]
    B, T, _ = x.shape
    return y.reshape(B, T * factor, w.shape[1])


if __name__ == "__main__":
    # TODO(synk): Transpose() is not defined in the provided source; it is assumed to
    # swap dims 1 and 2 (standard (B, T, C) <-> (B, C, T)), as elsewhere in nwcnet.
    B, T, C, factor = 2, 101, 16, 4          # odd T exercises the padding path

    key = jax.random.PRNGKey(0)
    kx, kw, kb = jax.random.split(key, 3)
    x = jax.random.normal(kx, (B, T, C), dtype=jnp.float32)
    weight = 0.02 * jax.random.normal(kw, (C, C, factor), dtype=jnp.float32)
    bias = 0.01 * jax.random.normal(kb, (C,), dtype=jnp.float32)

    ref = reference_upsample(x, weight, bias, factor)

    # 1) Default auto-picked tile.
    out = jax.block_until_ready(upsample(x, weight, bias, factor))
    assert out.shape == (B, T * factor, C), out.shape
    np.testing.assert_allclose(np.asarray(out), ref, rtol=2e-3, atol=5e-4)

    # 2) Forced small tile -> multi-step grid + packed-row padding path.
    out2 = jax.block_until_ready(upsample(x, weight, bias, factor, row_tile=8))
    np.testing.assert_allclose(np.asarray(out2), ref, rtol=2e-3, atol=5e-4)

    # 3) bf16 HBM I/O path (bf16 in/out, f32 tanh + accumulation in-kernel).
    x_bf = x.astype(jnp.bfloat16)
    ref_bf = reference_upsample(np.asarray(x_bf.astype(jnp.float32)), weight, bias, factor)
    out_bf = jax.block_until_ready(upsample(x_bf, weight, bias, factor))
    assert out_bf.dtype == jnp.bfloat16
    np.testing.assert_allclose(np.asarray(out_bf.astype(jnp.float32)), ref_bf,
                               rtol=3e-2, atol=3e-2)

    print("KERNEL_OK")
</pallas_src>

<mosaic_0001>
module attributes {stable_mosaic.version = 11 : i64} {
  func.func @_upsample_kernel(%arg0: i32, %arg1: memref<32x128xf32, #tpu.memory_space<vmem>>, %arg2: memref<128x512xf32, #tpu.memory_space<vmem>>, %arg3: memref<1x512xf32, #tpu.memory_space<vmem>>, %arg4: memref<32x512xf32, #tpu.memory_space<vmem>>) attributes {dimension_semantics = [#tpu.dimension_semantics<parallel>], iteration_bounds = array<i64: 1>, scalar_prefetch = 0 : i64, scratch_operands = 0 : i64, tpu.core_type = #tpu.core_type<tc>, window_params = [{transform_indices = @transform_0, window_bounds = array<i64: 32, 128>}, {pipeline_mode = #tpu.pipeline_mode<synchronous>, transform_indices = @transform_1, window_bounds = array<i64: 128, 512>}, {pipeline_mode = #tpu.pipeline_mode<synchronous>, transform_indices = @transform_2, window_bounds = array<i64: 1, 512>}, {transform_indices = @transform_3, window_bounds = array<i64: 32, 512>}]} {
    %c0 = arith.constant 0 : index
    %c0_0 = arith.constant 0 : index
    %0 = vector.load %arg1[%c0, %c0_0] : memref<32x128xf32, #tpu.memory_space<vmem>>, vector<32x128xf32>
    %1 = math.tanh %0 : vector<32x128xf32>
    %c0_1 = arith.constant 0 : index
    %c0_2 = arith.constant 0 : index
    %2 = vector.load %arg2[%c0_1, %c0_2] : memref<128x512xf32, #tpu.memory_space<vmem>>, vector<128x512xf32>
    %cst = arith.constant dense<0.000000e+00> : vector<32x512xf32>
    %3 = tpu.matmul %1, %2, %cst {dimension_numbers = #tpu.dot_dimension_numbers<[1], [0], [0], [1], [0, 0, 1, 1], [], []>} : vector<32x128xf32>, vector<128x512xf32>, vector<32x512xf32> -> vector<32x512xf32>
    %c0_3 = arith.constant 0 : index
    %c0_4 = arith.constant 0 : index
    %4 = vector.load %arg3[%c0_3, %c0_4] : memref<1x512xf32, #tpu.memory_space<vmem>>, vector<1x512xf32>
    %5 = vector.broadcast %4 : vector<1x512xf32> to vector<32x512xf32>
    %6 = arith.addf %3, %5 : vector<32x512xf32>
    %c0_5 = arith.constant 0 : index
    %c0_6 = arith.constant 0 : index
    %7 = vector.load %arg4[%c0_5, %c0_6] : memref<32x512xf32, #tpu.memory_space<vmem>>, vector<32x512xf32>
    tpu.vector_store %arg4[%c0_5, %c0_6], %6 {strides = array<i32>} : memref<32x512xf32, #tpu.memory_space<vmem>>, vector<32x512xf32>,
    return
  }
  func.func @transform_0(%arg0: i32) -> (i32, i32) {
    %c0_i32 = arith.constant 0 : i32
    %c0_i32_0 = arith.constant 0 : i32
    return %arg0, %c0_i32 : i32, i32
  }
  func.func @transform_1(%arg0: i32) -> (i32, i32) {
    %c0_i32 = arith.constant 0 : i32
    %c0_i32_0 = arith.constant 0 : i32
    %c0_i32_1 = arith.constant 0 : i32
    return %c0_i32, %c0_i32_0 : i32, i32
  }
  func.func @transform_2(%arg0: i32) -> (i32, i32) {
    %c0_i32 = arith.constant 0 : i32
    %c0_i32_0 = arith.constant 0 : i32
    %c0_i32_1 = arith.constant 0 : i32
    return %c0_i32, %c0_i32_0 : i32, i32
  }
  func.func @transform_3(%arg0: i32) -> (i32, i32) {
    %c0_i32 = arith.constant 0 : i32
    %c0_i32_0 = arith.constant 0 : i32
    return %arg0, %c0_i32 : i32, i32
  }
}

</mosaic_0001>

<llo_original>
// kernel: tpu_custom_call.1
$region0: #{tpu_custom_call.1}
  #allocation0 [shape = 'u32[]', space=smem, size = 0x4, offset = 0x4, fixed_abs, tag = 'smem constant byte address 0x4 - core index']
  #allocation1 [shape = 'u32[144,128]{1,0:T(1,128)}', space=vmem, size = 0x12000, scoped, tag = 'internal scratch']
  %s0 = inlined_call_operand.hbm [shape: f32[32,128], index: 0, kind: input, shape index: {}]
  %s1 = inlined_call_operand.hbm [shape: f32[128,512], index: 1, kind: input, shape index: {}]
  %s2 = inlined_call_operand.vmem [shape: f32[1,512], index: 2, kind: input, shape index: {}]
  %s3 = inlined_call_operand.hbm [shape: f32[32,512], index: 3, kind: output, shape index: {}]
  %s4 = sld [smem:[#allocation0]]
  $region30: #{tpu_custom_call.1} parent=0
    _
  %s6 = ssub.s32 1, %s4
  %s7 = scalar_select 0, %s6, %s4
  $region1: #{tpu_custom_call.1} parent=0
    #allocation2 [shape = 'u8[16384]{0}', space=vmem, size = 0x4000, scoped, tag = 'input window, operand 0, single buffered']
    #allocation3 [shape = 's32[1]{0}', space=sflag, size = 0x4, scoped, tag = 'scoped memory for tpu_custom_call.1']
    #allocation4 [shape = 's32[1]{0}', space=sflag, size = 0x4, scoped, tag = 'scoped memory for tpu_custom_call.1']
    #allocation5 [shape = 'u8[262144]{0}', space=vmem, size = 0x40000, scoped, tag = 'input window, operand 1, single buffered']
    #allocation6 [shape = 's32[1]{0}', space=sflag, size = 0x4, scoped, tag = 'scoped memory for tpu_custom_call.1']
    #allocation7 [shape = 'u8[65536]{0}', space=vmem, size = 0x10000, scoped, tag = 'output window, operand 0, single buffered']
    %8 = vsyncpa [#allocation3], 0
    %9 = vsyncpa [#allocation6], 0
    %10 = vsyncpa [#allocation4], 0
    // Predicated region
    $region2: #{tpu_custom_call.1} parent=1 // pred_check
      _
    $region3: #{tpu_custom_call.1} parent=1 // pred_check_branch
      %12 = sbr.rel (0) target = $region5
    $region4: #{tpu_custom_call.1} parent=1 // pred_region
      %s14 = ssub.s32 512, 512
      %15 = vsyncadd [#allocation3], %s14
      %s16 = sshll.u32 [#allocation2], 4
      %s17 = int_to_ptr.vmem [resolvable:$true] %s16
      %22 = dma.hbm_to_vmem [thread:$0]  %s0, 512, %s17, [#allocation3], 128, 128, 8
    $region5: #{tpu_custom_call.1} parent=1 // pred_fallthru
      _
    // Predicated region
    $region6: #{tpu_custom_call.1} parent=1 // pred_check
      _
    $region7: #{tpu_custom_call.1} parent=1 // pred_check_branch
      %24 = sbr.rel (0) target = $region9
    $region8: #{tpu_custom_call.1} parent=1 // pred_region
      %s26 = ssub.s32 8192, 8192
      %27 = vsyncadd [#allocation6], %s26
      %s28 = sshll.u32 [#allocation5], 4
      %s29 = int_to_ptr.vmem [resolvable:$true] %s28
      %34 = dma.hbm_to_vmem [thread:$0]  %s1, 8192, %s29, [#allocation6], 512, 512, 32
    $region9: #{tpu_custom_call.1} parent=1 // pred_fallthru
      _
    // Predicated region
    $region10: #{tpu_custom_call.1} parent=1 // pred_check
      _
    $region11: #{tpu_custom_call.1} parent=1 // pred_check_branch
      %36 = sbr.rel (0) target = $region13
    $region12: #{tpu_custom_call.1} parent=1 // pred_region
      _
    $region13: #{tpu_custom_call.1} parent=1 // pred_fallthru
      _
    // Predicated region
    $region14: #{tpu_custom_call.1} parent=1 // pred_check
      _
    $region15: #{tpu_custom_call.1} parent=1 // pred_check_branch
      %38 = sbr.rel (0) target = $region17
    $region16: #{tpu_custom_call.1} parent=1 // pred_region
      %39 = dma.done [#allocation3], 512
    $region17: #{tpu_custom_call.1} parent=1 // pred_fallthru
      _
    // Predicated region
    $region18: #{tpu_custom_call.1} parent=1 // pred_check
      _
    $region19: #{tpu_custom_call.1} parent=1 // pred_check_branch
      %41 = sbr.rel (0) target = $region21
    $region20: #{tpu_custom_call.1} parent=1 // pred_region
      %42 = dma.done [#allocation6], 8192
    $region21: #{tpu_custom_call.1} parent=1 // pred_fallthru
      _
    %v43 = vld [vmem:[#allocation2] sm:$0xff]
    %v44 = vld [vmem:[#allocation2 + $0x8] sm:$0xff]
    %v45 = vld [vmem:[#allocation2 + $0x10] sm:$0xff]
    %v46 = vld [vmem:[#allocation2 + $0x18] sm:$0xff]
    %v47 = vtanh.pop %v43
    %v48 = vtanh.pop %v44
    %v49 = vtanh.pop %v45
    %v50 = vtanh.pop %v46
    %v51 = vld [vmem:[#allocation5] sm:$0xff]
    %v52 = vld [vmem:[#allocation5 + $0x8] sm:$0xff]
    %v53 = vld [vmem:[#allocation5 + $0x10] sm:$0xff]
    %v54 = vld [vmem:[#allocation5 + $0x18] sm:$0xff]
    %v55 = vld [vmem:[#allocation5 + $0x20] sm:$0xff]
    %v56 = vld [vmem:[#allocation5 + $0x28] sm:$0xff]
    %v57 = vld [vmem:[#allocation5 + $0x30] sm:$0xff]
    %v58 = vld [vmem:[#allocation5 + $0x38] sm:$0xff]
    %v59 = vld [vmem:[#allocation5 + $0x40] sm:$0xff]
    %v60 = vld [vmem:[#allocation5 + $0x48] sm:$0xff]
    %v61 = vld [vmem:[#allocation5 + $0x50] sm:$0xff]
    %v62 = vld [vmem:[#allocation5 + $0x58] sm:$0xff]
    %v63 = vld [vmem:[#allocation5 + $0x60] sm:$0xff]
    %v64 = vld [vmem:[#allocation5 + $0x68] sm:$0xff]
    %v65 = vld [vmem:[#allocation5 + $0x70] sm:$0xff]
    %v66 = vld [vmem:[#allocation5 + $0x78] sm:$0xff]
    %v67 = vld [vmem:[#allocation5 + $0x80] sm:$0xff]
    %v68 = vld [vmem:[#allocation5 + $0x88] sm:$0xff]
    %v69 = vld [vmem:[#allocation5 + $0x90] sm:$0xff]
    %v70 = vld [vmem:[#allocation5 + $0x98] sm:$0xff]
    %v71 = vld [vmem:[#allocation5 + $0xa0] sm:$0xff]
    %v72 = vld [vmem:[#allocation5 + $0xa8] sm:$0xff]
    %v73 = vld [vmem:[#allocation5 + $0xb0] sm:$0xff]
    %v74 = vld [vmem:[#allocation5 + $0xb8] sm:$0xff]
    %v75 = vld [vmem:[#allocation5 + $0xc0] sm:$0xff]
    %v76 = vld [vmem:[#allocation5 + $0xc8] sm:$0xff]
    %v77 = vld [vmem:[#allocation5 + $0xd0] sm:$0xff]
    %v78 = vld [vmem:[#allocation5 + $0xd8] sm:$0xff]
    %v79 = vld [vmem:[#allocation5 + $0xe0] sm:$0xff]
    %v80 = vld [vmem:[#allocation5 + $0xe8] sm:$0xff]
    %v81 = vld [vmem:[#allocation5 + $0xf0] sm:$0xff]
    %v82 = vld [vmem:[#allocation5 + $0xf8] sm:$0xff]
    %v83 = vld [vmem:[#allocation5 + $0x100] sm:$0xff]
    %v84 = vld [vmem:[#allocation5 + $0x108] sm:$0xff]
    %v85 = vld [vmem:[#allocation5 + $0x110] sm:$0xff]
    %v86 = vld [vmem:[#allocation5 + $0x118] sm:$0xff]
    %v87 = vld [vmem:[#allocation5 + $0x120] sm:$0xff]
    %v88 = vld [vmem:[#allocation5 + $0x128] sm:$0xff]
    %v89 = vld [vmem:[#allocation5 + $0x130] sm:$0xff]
    %v90 = vld [vmem:[#allocation5 + $0x138] sm:$0xff]
    %v91 = vld [vmem:[#allocation5 + $0x140] sm:$0xff]
    %v92 = vld [vmem:[#allocation5 + $0x148] sm:$0xff]
    %v93 = vld [vmem:[#allocation5 + $0x150] sm:$0xff]
    %v94 = vld [vmem:[#allocation5 + $0x158] sm:$0xff]
    %v95 = vld [vmem:[#allocation5 + $0x160] sm:$0xff]
    %v96 = vld [vmem:[#allocation5 + $0x168] sm:$0xff]
    %v97 = vld [vmem:[#allocation5 + $0x170] sm:$0xff]
    %v98 = vld [vmem:[#allocation5 + $0x178] sm:$0xff]
    %v99 = vld [vmem:[#allocation5 + $0x180] sm:$0xff]
    %v100 = vld [vmem:[#allocation5 + $0x188] sm:$0xff]
    %v101 = vld [vmem:[#allocation5 + $0x190] sm:$0xff]
    %v102 = vld [vmem:[#allocation5 + $0x198] sm:$0xff]
    %v103 = vld [vmem:[#allocation5 + $0x1a0] sm:$0xff]
    %v104 = vld [vmem:[#allocation5 + $0x1a8] sm:$0xff]
    %v105 = vld [vmem:[#allocation5 + $0x1b0] sm:$0xff]
    %v106 = vld [vmem:[#allocation5 + $0x1b8] sm:$0xff]
    %v107 = vld [vmem:[#allocation5 + $0x1c0] sm:$0xff]
    %v108 = vld [vmem:[#allocation5 + $0x1c8] sm:$0xff]
    %v109 = vld [vmem:[#allocation5 + $0x1d0] sm:$0xff]
    %v110 = vld [vmem:[#allocation5 + $0x1d8] sm:$0xff]
    %v111 = vld [vmem:[#allocation5 + $0x1e0] sm:$0xff]
    %v112 = vld [vmem:[#allocation5 + $0x1e8] sm:$0xff]
    %v113 = vld [vmem:[#allocation5 + $0x1f0] sm:$0xff]
    %v114 = vld [vmem:[#allocation5 + $0x1f8] sm:$0xff]
    %v115 = vld [vmem:[%s2] sm:$0xf]
    %v117 = vlaneseq
    %v118 = vshrl.u32 %v117, 7
    %v119 = vsub.s32 0, %v118
    %v120 = vrot.slane %v115, %v119
    %v121 = vlaneseq
    %v122 = vshrl.u32 %v121, 7
    %v123 = vsub.s32 1, %v122
    %v124 = vrot.slane %v115, %v123
    %v125 = vlaneseq
    %v126 = vshrl.u32 %v125, 7
    %v127 = vsub.s32 2, %v126
    %v128 = vrot.slane %v115, %v127
    %v129 = vlaneseq
    %v130 = vshrl.u32 %v129, 7
    %v131 = vsub.s32 3, %v130
    %v132 = vrot.slane %v115, %v131
    %137 = vmatprep.subr.mxu0 %v52
    %138 = vmatpush1.msra.mxu0 %v51
    %139 = vmatprep.subr.mxu0 %v56
    %140 = vmatpush1.msra.mxu0 %v55
    %141 = vmatprep.subr.mxu0 %v60
    %142 = vmatpush1.msra.mxu0 %v59
    %143 = vmatprep.subr.mxu0 %v64
    %144 = vmatpush1.msra.mxu0 %v63
    %145 = vmatprep.subr.mxu0 %v68
    %146 = vmatpush1.msra.mxu0 %v67
    %147 = vmatprep.subr.mxu0 %v72
    %148 = vmatpush1.msra.mxu0 %v71
    %149 = vmatprep.subr.mxu0 %v76
    %150 = vmatpush1.msra.mxu0 %v75
    %151 = vmatprep.subr.mxu0 %v80
    %152 = vmatpush1.msra.mxu0 %v79
    %153 = vmatprep.subr.mxu0 %v84
    %154 = vmatpush1.msra.mxu0 %v83
    %155 = vmatprep.subr.mxu0 %v88
    %156 = vmatpush1.msra.mxu0 %v87
    %157 = vmatprep.subr.mxu0 %v92
    %158 = vmatpush1.msra.mxu0 %v91
    %159 = vmatprep.subr.mxu0 %v96
    %160 = vmatpush1.msra.mxu0 %v95
    %161 = vmatprep.subr.mxu0 %v100
    %162 = vmatpush1.msra.mxu0 %v99
    %163 = vmatprep.subr.mxu0 %v104
    %164 = vmatpush1.msra.mxu0 %v103
    %165 = vmatprep.subr.mxu0 %v108
    %166 = vmatpush1.msra.mxu0 %v107
    %167 = vmatprep.subr.mxu0 %v112
    %168 = vmatpush1.msra.mxu0 %v111
    %169 = vmatprep.subr.mxu0 0.0
    %170 = vmatpush1.msra.mxu0 0.0
    %171 = vmatprep.subr.mxu0 0.0
    %172 = vmatpush1.msra.mxu0 0.0
    %173 = vmatprep.subr.mxu0 0.0
    %174 = vmatpush1.msra.mxu0 0.0
    %175 = vmatprep.subr.mxu0 0.0
    %176 = vmatpush1.msra.mxu0 0.0
    %177 = vmatprep.subr.mxu0 0.0
    %178 = vmatpush1.msra.mxu0 0.0
    %179 = vmatprep.subr.mxu0 0.0
    %180 = vmatpush1.msra.mxu0 0.0
    %181 = vmatprep.subr.mxu0 0.0
    %182 = vmatpush1.msra.mxu0 0.0
    %183 = vmatprep.subr.mxu0 0.0
    %184 = vmatpush1.msra.mxu0 0.0
    %185 = vmatprep.subr.mxu0 0.0
    %186 = vmatpush1.msra.mxu0 0.0
    %187 = vmatprep.subr.mxu0 0.0
    %188 = vmatpush1.msra.mxu0 0.0
    %189 = vmatprep.subr.mxu0 0.0
    %190 = vmatpush1.msra.mxu0 0.0
    %191 = vmatprep.subr.mxu0 0.0
    %192 = vmatpush1.msra.mxu0 0.0
    %193 = vmatprep.subr.mxu0 0.0
    %194 = vmatpush1.msra.mxu0 0.0
    %195 = vmatprep.subr.mxu0 0.0
    %196 = vmatpush1.msra.mxu0 0.0
    %197 = vmatprep.subr.mxu0 0.0
    %198 = vmatpush1.msra.mxu0 0.0
    %199 = vmatprep.subr.mxu0 0.0
    %200 = vmatpush1.msra.mxu0 0.0
    %201 = vmatprep.mubr.f32.mxu0 0.0
    %202 = vmatmul.mubr.f32.gmra.mrb[0].mxu0 %v47
    %v203 = vpop.f32.mrb[0].mxu0
    %v204 = vadd.f32 %v120, %v203
    %v205 = vpop.f32.mrb[0].mxu0
    %v206 = vadd.f32 %v124, %v205
    %207 = vmatprep.mubr.f32.mxu0 0.0
    %208 = vmatmul.mubr.f32.gmra.mrb[0].mxu0 %v48
    %v209 = vpop.f32.mrb[0].mxu0
    %v210 = vadd.f32 %v120, %v209
    %v211 = vpop.f32.mrb[0].mxu0
    %v212 = vadd.f32 %v124, %v211
    %213 = vmatprep.mubr.f32.mxu0 0.0
    %214 = vmatmul.mubr.f32.gmra.mrb[0].mxu0 %v49
    %v215 = vpop.f32.mrb[0].mxu0
    %v216 = vadd.f32 %v120, %v215
    %v217 = vpop.f32.mrb[0].mxu0
    %v218 = vadd.f32 %v124, %v217
    %219 = vmatprep.mubr.f32.mxu0 0.0
    %220 = vmatmul.mubr.f32.gmra.mrb[0].mxu0 %v50
    %v221 = vpop.f32.mrb[0].mxu0
    %v222 = vadd.f32 %v120, %v221
    %v223 = vpop.f32.mrb[0].mxu0
    %v224 = vadd.f32 %v124, %v223
    %225 = vdwg.mxu0
    %226 = vmatprep.subr.mxu0 %v54
    %227 = vmatpush1.msra.mxu0 %v53
    %228 = vmatprep.subr.mxu0 %v58
    %229 = vmatpush1.msra.mxu0 %v57
    %230 = vmatprep.subr.mxu0 %v62
    %231 = vmatpush1.msra.mxu0 %v61
    %232 = vmatprep.subr.mxu0 %v66
    %233 = vmatpush1.msra.mxu0 %v65
    %234 = vmatprep.subr.mxu0 %v70
    %235 = vmatpush1.msra.mxu0 %v69
    %236 = vmatprep.subr.mxu0 %v74
    %237 = vmatpush1.msra.mxu0 %v73
    %238 = vmatprep.subr.mxu0 %v78
    %239 = vmatpush1.msra.mxu0 %v77
    %240 = vmatprep.subr.mxu0 %v82
    %241 = vmatpush1.msra.mxu0 %v81
    %242 = vmatprep.subr.mxu0 %v86
    %243 = vmatpush1.msra.mxu0 %v85
    %244 = vmatprep.subr.mxu0 %v90
    %245 = vmatpush1.msra.mxu0 %v89
    %246 = vmatprep.subr.mxu0 %v94
    %247 = vmatpush1.msra.mxu0 %v93
    %248 = vmatprep.subr.mxu0 %v98
    %249 = vmatpush1.msra.mxu0 %v97
    %250 = vmatprep.subr.mxu0 %v102
    %251 = vmatpush1.msra.mxu0 %v101
    %252 = vmatprep.subr.mxu0 %v106
    %253 = vmatpush1.msra.mxu0 %v105
    %254 = vmatprep.subr.mxu0 %v110
    %255 = vmatpush1.msra.mxu0 %v109
    %256 = vmatprep.subr.mxu0 %v114
    %257 = vmatpush1.msra.mxu0 %v113
    %258 = vmatprep.subr.mxu0 0.0
    %259 = vmatpush1.msra.mxu0 0.0
    %260 = vmatprep.subr.mxu0 0.0
    %261 = vmatpush1.msra.mxu0 0.0
    %262 = vmatprep.subr.mxu0 0.0
    %263 = vmatpush1.msra.mxu0 0.0
    %264 = vmatprep.subr.mxu0 0.0
    %265 = vmatpush1.msra.mxu0 0.0
    %266 = vmatprep.subr.mxu0 0.0
    %267 = vmatpush1.msra.mxu0 0.0
    %268 = vmatprep.subr.mxu0 0.0
    %269 = vmatpush1.msra.mxu0 0.0
    %270 = vmatprep.subr.mxu0 0.0
    %271 = vmatpush1.msra.mxu0 0.0
    %272 = vmatprep.subr.mxu0 0.0
    %273 = vmatpush1.msra.mxu0 0.0
    %274 = vmatprep.subr.mxu0 0.0
    %275 = vmatpush1.msra.mxu0 0.0
    %276 = vmatprep.subr.mxu0 0.0
    %277 = vmatpush1.msra.mxu0 0.0
    %278 = vmatprep.subr.mxu0 0.0
    %279 = vmatpush1.msra.mxu0 0.0
    %280 = vmatprep.subr.mxu0 0.0
    %281 = vmatpush1.msra.mxu0 0.0
    %282 = vmatprep.subr.mxu0 0.0
    %283 = vmatpush1.msra.mxu0 0.0
    %284 = vmatprep.subr.mxu0 0.0
    %285 = vmatpush1.msra.mxu0 0.0
    %286 = vmatprep.subr.mxu0 0.0
    %287 = vmatpush1.msra.mxu0 0.0
    %288 = vmatprep.subr.mxu0 0.0
    %289 = vmatpush1.msra.mxu0 0.0
    %290 = vmatprep.mubr.f32.mxu0 0.0
    %291 = vmatmul.mubr.f32.gmra.mrb[0].mxu0 %v47
    %v292 = vpop.f32.mrb[0].mxu0
    %v293 = vadd.f32 %v128, %v292
    %v294 = vpop.f32.mrb[0].mxu0
    %v295 = vadd.f32 %v132, %v294
    %296 = vmatprep.mubr.f32.mxu0 0.0
    %297 = vmatmul.mubr.f32.gmra.mrb[0].mxu0 %v48
    %v298 = vpop.f32.mrb[0].mxu0
    %v299 = vadd.f32 %v128, %v298
    %v300 = vpop.f32.mrb[0].mxu0
    %v301 = vadd.f32 %v132, %v300
    %302 = vmatprep.mubr.f32.mxu0 0.0
    %303 = vmatmul.mubr.f32.gmra.mrb[0].mxu0 %v49
    %v304 = vpop.f32.mrb[0].mxu0
    %v305 = vadd.f32 %v128, %v304
    %v306 = vpop.f32.mrb[0].mxu0
    %v307 = vadd.f32 %v132, %v306
    %308 = vmatprep.mubr.f32.mxu0 0.0
    %309 = vmatmul.mubr.f32.gmra.mrb[0].mxu0 %v50
    %v310 = vpop.f32.mrb[0].mxu0
    %v311 = vadd.f32 %v128, %v310
    %v312 = vpop.f32.mrb[0].mxu0
    %v313 = vadd.f32 %v132, %v312
    %314 = vdwg.mxu0
    %315 = vst [vmem:[#allocation7] sm:$0xff] %v204
    %316 = vst [vmem:[#allocation7 + $0x8] sm:$0xff] %v206
    %317 = vst [vmem:[#allocation7 + $0x10] sm:$0xff] %v293
    %318 = vst [vmem:[#allocation7 + $0x18] sm:$0xff] %v295
    %319 = vst [vmem:[#allocation7 + $0x20] sm:$0xff] %v210
    %320 = vst [vmem:[#allocation7 + $0x28] sm:$0xff] %v212
    %321 = vst [vmem:[#allocation7 + $0x30] sm:$0xff] %v299
    %322 = vst [vmem:[#allocation7 + $0x38] sm:$0xff] %v301
    %323 = vst [vmem:[#allocation7 + $0x40] sm:$0xff] %v216
    %324 = vst [vmem:[#allocation7 + $0x48] sm:$0xff] %v218
    %325 = vst [vmem:[#allocation7 + $0x50] sm:$0xff] %v305
    %326 = vst [vmem:[#allocation7 + $0x58] sm:$0xff] %v307
    %327 = vst [vmem:[#allocation7 + $0x60] sm:$0xff] %v222
    %328 = vst [vmem:[#allocation7 + $0x68] sm:$0xff] %v224
    %329 = vst [vmem:[#allocation7 + $0x70] sm:$0xff] %v311
    %330 = vst [vmem:[#allocation7 + $0x78] sm:$0xff] %v313
    // Predicated region
    $region22: #{tpu_custom_call.1} parent=1 // pred_check
      _
    $region23: #{tpu_custom_call.1} parent=1 // pred_check_branch
      %332 = sbr.rel (0) target = $region25
    $region24: #{tpu_custom_call.1} parent=1 // pred_region
      %s334 = ssub.s32 2048, 2048
      %335 = vsyncadd [#allocation4], %s334
      %s336 = sshll.u32 [#allocation7], 4
      %s337 = int_to_ptr.vmem [resolvable:$true] %s336
      %342 = dma.vmem_to_hbm [thread:$0]  %s337, 2048, %s3, [#allocation4], 512, 512, 32
    $region25: #{tpu_custom_call.1} parent=1 // pred_fallthru
      _
    // Predicated region
    $region26: #{tpu_custom_call.1} parent=1 // pred_check
      _
    $region27: #{tpu_custom_call.1} parent=1 // pred_check_branch
      %344 = sbr.rel (0) target = $region29
    $region28: #{tpu_custom_call.1} parent=1 // pred_region
      %345 = dma.done [#allocation4], 2048
    $region29: #{tpu_custom_call.1} parent=1 // pred_fallthru
      _
    %346 = vsyncpa [#allocation3], 1
    %347 = vsyncpa [#allocation6], 1
    %348 = vsyncpa [#allocation4], 1

</llo_original>
